<compile_context>
chip_gen: v6e
topology: v6e:2x2x1
jax: 0.10.0
libtpu: 0.0.40
codegen_flags: <defaults>
</compile_context>

<pallas_src>
import functools

import jax
import jax.numpy as jnp
from jax.experimental import pallas as pl
from jax.experimental.pallas import tpu as pltpu


def _round_up(n, m):
    return ((n + m - 1) // m) * m


def _qnet_kernel(x_ref, w1_ref, b1_ref, w2_ref, b2_ref, o_ref, *, d_out):
    """relu(x @ W1 + b1) @ W2 + b2 for one batch tile; operands resident in VMEM."""
    w_dtype = w1_ref.dtype
    # Explicit cast: with bf16 params this is a genuine bf16 x bf16 MXU matmul
    # (halves x bytes, full rate on v6e/v7x). No-op when params are f32.
    x = x_ref[...].astype(w_dtype)
    h = jnp.dot(x, w1_ref[...], preferred_element_type=jnp.float32)
    h = jnp.maximum(h + b1_ref[...], 0.0)                 # bias + ReLU on the f32 accumulator
    y = jnp.dot(h.astype(w_dtype), w2_ref[...], preferred_element_type=jnp.float32)
    # Store ONLY the real output columns (unpadded (tile_b, d_out) block).
    # The masked store is free slack in an HBM-bound kernel and cuts HBM write
    # bytes ~32x vs. the padded 128-lane output.
    o_ref[...] = (y[:, :d_out] + b2_ref[...]).astype(o_ref.dtype)


def prepare_params(w1, b1, w2, b2, dtype=None):
    """One-time relayout of PyTorch-style params into kernel layout.

    w1: (H, D_in), b1: (H,), w2: (D_out, H), b2: (D_out,).
    Returns pre-transposed, padded arrays. Do this ONCE, not per forward call.
    Pass dtype=jnp.bfloat16 to enable the native bf16 MXU path on v6e/v7x.
    """
    w1 = jnp.asarray(w1)
    dtype = dtype or w1.dtype
    H, D_in = w1.shape
    D_out = w2.shape[0]
    H_pad = _round_up(H, 128)
    D_out_pad = _round_up(D_out, 128)

    # Zero padding keeps the math exact: padded hidden columns are relu(0+0)=0
    # and padded W2 result columns are never stored (kernel slices y[:, :d_out]).
    w1_t = jnp.zeros((D_in, H_pad), dtype).at[:, :H].set(jnp.asarray(w1, dtype).T)
    b1_r = jnp.zeros((1, H_pad), dtype).at[0, :H].set(jnp.asarray(b1, dtype))
    w2_t = jnp.zeros((H_pad, D_out_pad), dtype).at[:H, :D_out].set(jnp.asarray(w2, dtype).T)
    b2_r = jnp.asarray(b2, dtype).reshape(1, D_out)       # unpadded (1, d_out)
    return {"w1_t": w1_t, "b1": b1_r, "w2_t": w2_t, "b2": b2_r}


def linear_qnet_forward(x, w1_t, b1, w2_t, b2, *, block_b=1024):
    """Fused forward: relu(x @ W1 + b1) @ W2 + b2.  x: (B, D_in) -> (B, d_out)."""
    B, D_in = x.shape
    H_pad = w1_t.shape[1]
    D_out_pad = w2_t.shape[1]
    d_out = b2.shape[-1]
    kernel = functools.partial(_qnet_kernel, d_out=d_out)
    vmem = pltpu.MemorySpace.VMEM

    if B > block_b:
        # Replay/training path: tile the batch only; weights stay VMEM-resident
        # across tiles (constant index_maps). Any large B is handled via
        # cdiv + zero-padded tail tile (padded rows computed then discarded).
        n_tiles = pl.cdiv(B, block_b)
        B_pad = n_tiles * block_b
        x_in = x if B_pad == B else jnp.zeros((B_pad, D_in), x.dtype).at[:B].set(x)
        out = pl.pallas_call(
            kernel,
            out_shape=jax.ShapeDtypeStruct((B_pad, d_out), x.dtype),
            grid=(n_tiles,),
            in_specs=[
                pl.BlockSpec((block_b, D_in), lambda i: (i, 0)),
                pl.BlockSpec((D_in, H_pad), lambda i: (0, 0)),       # resident
                pl.BlockSpec((1, H_pad), lambda i: (0, 0)),          # resident
                pl.BlockSpec((H_pad, D_out_pad), lambda i: (0, 0)),  # resident
                pl.BlockSpec((1, d_out), lambda i: (0, 0)),          # resident
            ],
            out_specs=pl.BlockSpec((block_b, d_out), lambda i: (i, 0)),
            compiler_params=pltpu.CompilerParams(
                # "parallel" lets megacore (v7x: 2 TCs) split the batch tiles.
                # TODO(synk): verify in xprof on v7x that the batch grid splits
                # across both cores; switch to pltpu.CORE_PARALLEL if it does not.
                dimension_semantics=("parallel",),
            ),
        )(x_in, w1_t, b1, w2_t, b2)
        return out if B_pad == B else out[:B]

    # Acting path (small B): no grid, whole operands in VMEM — skips the
    # 1-step pipeline prologue/epilogue. Explicit VMEM limit sized from the
    # actual operands so the v5e 16 MiB scoped default is never a surprise.
    out_bytes = int(B) * int(d_out) * x.dtype.itemsize
    in_bytes = sum(int(a.size) * a.dtype.itemsize for a in (x, w1_t, b1, w2_t, b2))
    vmem_limit = int(min(48 << 20, max(16 << 20, 4 * (in_bytes + out_bytes))))
    out = pl.pallas_call(
        kernel,
        out_shape=jax.ShapeDtypeStruct((B, d_out), x.dtype),
        in_specs=[pl.BlockSpec(memory_space=vmem)] * 5,
        out_specs=pl.BlockSpec(memory_space=vmem),
        compiler_params=pltpu.CompilerParams(vmem_limit_bytes=vmem_limit),
    )(x, w1_t, b1, w2_t, b2)
    return out


def init_params(key, input_size, hidden_size, output_size, dtype=jnp.float32):
    """PyTorch nn.Linear-style init: U(-1/sqrt(fan_in), 1/sqrt(fan_in))."""
    k1, k2, k3, k4 = jax.random.split(key, 4)
    bound1 = 1.0 / (input_size ** 0.5)
    bound2 = 1.0 / (hidden_size ** 0.5)
    w1 = jax.random.uniform(k1, (hidden_size, input_size), dtype, -bound1, bound1)
    b1 = jax.random.uniform(k2, (hidden_size,), dtype, -bound1, bound1)
    w2 = jax.random.uniform(k3, (output_size, hidden_size), dtype, -bound2, bound2)
    b2 = jax.random.uniform(k4, (output_size,), dtype, -bound2, bound2)
    return w1, b1, w2, b2


# TODO(synk): Linear_QNet.save() (torch.save / filesystem checkpointing) has no
# Pallas equivalent and is intentionally not implemented.

if __name__ == "__main__":
    # Small shapes consistent with the snake-game QNet (scaled demo).
    batch, input_size, hidden_size, output_size = 8, 16, 32, 4

    key = jax.random.PRNGKey(0)
    kx, kxb, kp = jax.random.split(key, 3)
    x_small = jax.random.normal(kx, (batch, input_size), dtype=jnp.float32)
    x_big = jax.random.normal(kxb, (600, input_size), dtype=jnp.float32)  # exercises cdiv + tail tile

    w1, b1, w2, b2 = init_params(kp, input_size, hidden_size, output_size)
    params = prepare_params(w1, b1, w2, b2)        # one-time relayout (transpose + pad)

    # Production default is block_b=1024; block_b=256 here only so the gridded
    # cdiv/tail path is exercised at demo scale.
    fwd = jax.jit(functools.partial(linear_qnet_forward, block_b=256))

    out_small = jax.block_until_ready(fwd(x_small, **params))   # acting path (no grid)
    out_big = jax.block_until_ready(fwd(x_big, **params))       # replay path (batch grid, tail-padded)

    def ref_fn(xv):
        return jnp.maximum(xv @ w1.T + b1, 0.0) @ w2.T + b2

    assert out_small.shape == (batch, output_size)
    assert out_big.shape == (600, output_size)
    assert jnp.allclose(out_small, ref_fn(x_small), atol=1e-5, rtol=1e-5)
    assert jnp.allclose(out_big, ref_fn(x_big), atol=1e-5, rtol=1e-5)

    # bf16 param path (native MXU rate on v6e/v7x); f32 accumulation, looser tol.
    params_bf16 = prepare_params(w1, b1, w2, b2, dtype=jnp.bfloat16)
    out_bf16 = jax.block_until_ready(fwd(x_small, **params_bf16))
    assert out_bf16.shape == (batch, output_size)
    assert jnp.allclose(out_bf16, ref_fn(x_small), atol=5e-2, rtol=5e-2)

    print("KERNEL_OK")
</pallas_src>

<mosaic_0001>
module attributes {stable_mosaic.version = 11 : i64} {
  func.func @_qnet_kernel(%arg0: memref<8x16xf32, #tpu.memory_space<vmem>>, %arg1: memref<16x128xf32, #tpu.memory_space<vmem>>, %arg2: memref<1x128xf32, #tpu.memory_space<vmem>>, %arg3: memref<128x128xf32, #tpu.memory_space<vmem>>, %arg4: memref<1x4xf32, #tpu.memory_space<vmem>>, %arg5: memref<8x4xf32, #tpu.memory_space<vmem>>) attributes {dimension_semantics = [], scalar_prefetch = 0 : i64, scratch_operands = 0 : i64, tpu.core_type = #tpu.core_type<tc>} {
    %c0 = arith.constant 0 : index
    %c0_0 = arith.constant 0 : index
    %0 = vector.load %arg0[%c0, %c0_0] : memref<8x16xf32, #tpu.memory_space<vmem>>, vector<8x16xf32>
    %c0_1 = arith.constant 0 : index
    %c0_2 = arith.constant 0 : index
    %1 = vector.load %arg1[%c0_1, %c0_2] : memref<16x128xf32, #tpu.memory_space<vmem>>, vector<16x128xf32>
    %cst = arith.constant dense<0.000000e+00> : vector<8x128xf32>
    %2 = tpu.matmul %0, %1, %cst {dimension_numbers = #tpu.dot_dimension_numbers<[1], [0], [0], [1], [0, 0, 1, 1], [], []>} : vector<8x16xf32>, vector<16x128xf32>, vector<8x128xf32> -> vector<8x128xf32>
    %c0_3 = arith.constant 0 : index
    %c0_4 = arith.constant 0 : index
    %3 = vector.load %arg2[%c0_3, %c0_4] : memref<1x128xf32, #tpu.memory_space<vmem>>, vector<1x128xf32>
    %4 = vector.broadcast %3 : vector<1x128xf32> to vector<8x128xf32>
    %5 = arith.addf %2, %4 : vector<8x128xf32>
    %cst_5 = arith.constant 0.000000e+00 : f32
    %6 = vector.broadcast %cst_5 : f32 to vector<8x128xf32>
    %7 = arith.maximumf %5, %6 : vector<8x128xf32>
    %c0_6 = arith.constant 0 : index
    %c0_7 = arith.constant 0 : index
    %8 = vector.load %arg3[%c0_6, %c0_7] : memref<128x128xf32, #tpu.memory_space<vmem>>, vector<128x128xf32>
    %cst_8 = arith.constant dense<0.000000e+00> : vector<8x128xf32>
    %9 = tpu.matmul %7, %8, %cst_8 {dimension_numbers = #tpu.dot_dimension_numbers<[1], [0], [0], [1], [0, 0, 1, 1], [], []>} : vector<8x128xf32>, vector<128x128xf32>, vector<8x128xf32> -> vector<8x128xf32>
    %10 = vector.extract_strided_slice %9 {offsets = [0, 0], sizes = [8, 4], strides = [1, 1]} : vector<8x128xf32> to vector<8x4xf32>
    %c0_9 = arith.constant 0 : index
    %c0_10 = arith.constant 0 : index
    %11 = vector.load %arg4[%c0_9, %c0_10] : memref<1x4xf32, #tpu.memory_space<vmem>>, vector<1x4xf32>
    %12 = vector.broadcast %11 : vector<1x4xf32> to vector<8x4xf32>
    %13 = arith.addf %10, %12 : vector<8x4xf32>
    %c0_11 = arith.constant 0 : index
    %c0_12 = arith.constant 0 : index
    %14 = vector.load %arg5[%c0_11, %c0_12] : memref<8x4xf32, #tpu.memory_space<vmem>>, vector<8x4xf32>
    tpu.vector_store %arg5[%c0_11, %c0_12], %13 {strides = array<i32>} : memref<8x4xf32, #tpu.memory_space<vmem>>, vector<8x4xf32>,
    return
  }
}

</mosaic_0001>

<llo_original>
// kernel: linear_qnet_forward.1
$region0: #{linear_qnet_forward.1}
  #allocation0 [shape = 'u32[]', space=smem, size = 0x4, offset = 0x4, fixed_abs, tag = 'smem constant byte address 0x4 - core index']
  #allocation1 [shape = 'u32[144,128]{1,0:T(1,128)}', space=vmem, size = 0x12000, scoped, tag = 'internal scratch']
  %s0 = inlined_call_operand.hbm [shape: f32[8,16], index: 0, kind: input, shape index: {}]
  %s1 = inlined_call_operand.hbm [shape: f32[16,128], index: 1, kind: input, shape index: {}]
  %s2 = inlined_call_operand.vmem [shape: f32[1,128], index: 2, kind: input, shape index: {}]
  %s3 = inlined_call_operand.hbm [shape: f32[128,128], index: 3, kind: input, shape index: {}]
  %s4 = inlined_call_operand.vmem [shape: f32[1,4], index: 4, kind: input, shape index: {}]
  %s5 = inlined_call_operand.vmem [shape: f32[8,4], index: 5, kind: output, shape index: {}]
  %s6 = sld [smem:[#allocation0]]
  $region42: #{linear_qnet_forward.1} parent=0
    _
  %s8 = ssub.s32 1, %s6
  %s9 = scalar_select 0, %s8, %s6
  $region1: #{linear_qnet_forward.1} parent=0
    #allocation2 [shape = 'u8[4096]{0}', space=vmem, size = 0x1000, scoped, tag = 'input window, operand 0, single buffered']
    #allocation3 [shape = 's32[1]{0}', space=sflag, size = 0x4, scoped, tag = 'scoped memory for linear_qnet_forward.1']
    #allocation4 [shape = 'u8[8192]{0}', space=vmem, size = 0x2000, scoped, tag = 'input window, operand 1, single buffered']
    #allocation5 [shape = 's32[1]{0}', space=sflag, size = 0x4, scoped, tag = 'scoped memory for linear_qnet_forward.1']
    #allocation6 [shape = 'u8[65536]{0}', space=vmem, size = 0x10000, scoped, tag = 'input window, operand 3, single buffered']
    %10 = vsyncpa [#allocation3], 0
    %11 = vsyncpa [#allocation5], 0
    // Predicated region
    $region2: #{linear_qnet_forward.1} parent=1 // pred_check
      _
    $region3: #{linear_qnet_forward.1} parent=1 // pred_check_branch
      %13 = sbr.rel (0) target = $region5
    $region4: #{linear_qnet_forward.1} parent=1 // pred_region
      %s15 = ssub.s32 128, 128
      %16 = vsyncadd [#allocation3], %s15
      %s18 = sshll.u32 [#allocation2], 4
      %s19 = int_to_ptr.vmem [resolvable:$true] %s18
      %21 = dma.hbm_to_vmem [thread:$0]  %s0, 128, %s19, [#allocation3]
    $region5: #{linear_qnet_forward.1} parent=1 // pred_fallthru
      _
    // Predicated region
    $region6: #{linear_qnet_forward.1} parent=1 // pred_check
      _
    $region7: #{linear_qnet_forward.1} parent=1 // pred_check_branch
      %23 = sbr.rel (0) target = $region9
    $region8: #{linear_qnet_forward.1} parent=1 // pred_region
      %s25 = ssub.s32 256, 256
      %26 = vsyncadd [#allocation5], %s25
      %s27 = sshll.u32 [#allocation4], 4
      %s28 = int_to_ptr.vmem [resolvable:$true] %s27
      %33 = dma.hbm_to_vmem [thread:$0]  %s1, 256, %s28, [#allocation5], 128, 128, 8
    $region9: #{linear_qnet_forward.1} parent=1 // pred_fallthru
      _
    // Predicated region
    $region10: #{linear_qnet_forward.1} parent=1 // pred_check
      _
    $region11: #{linear_qnet_forward.1} parent=1 // pred_check_branch
      %35 = sbr.rel (0) target = $region13
    $region12: #{linear_qnet_forward.1} parent=1 // pred_region
      _
    $region13: #{linear_qnet_forward.1} parent=1 // pred_fallthru
      _
    // Predicated region
    $region14: #{linear_qnet_forward.1} parent=1 // pred_check
      _
    $region15: #{linear_qnet_forward.1} parent=1 // pred_check_branch
      %37 = sbr.rel (0) target = $region17
    $region16: #{linear_qnet_forward.1} parent=1 // pred_region
      %s39 = ssub.s32 2048, 2048
      %40 = vsyncadd [#allocation5], %s39
      %s41 = sshll.u32 [#allocation6], 4
      %s42 = int_to_ptr.vmem [resolvable:$true] %s41
      %47 = dma.hbm_to_vmem [thread:$0]  %s3, 2048, %s42, [#allocation5], 128, 128, 8
    $region17: #{linear_qnet_forward.1} parent=1 // pred_fallthru
      _
    // Predicated region
    $region18: #{linear_qnet_forward.1} parent=1 // pred_check
      _
    $region19: #{linear_qnet_forward.1} parent=1 // pred_check_branch
      %49 = sbr.rel (0) target = $region21
    $region20: #{linear_qnet_forward.1} parent=1 // pred_region
      _
    $region21: #{linear_qnet_forward.1} parent=1 // pred_fallthru
      _
    // Predicated region
    $region22: #{linear_qnet_forward.1} parent=1 // pred_check
      _
    $region23: #{linear_qnet_forward.1} parent=1 // pred_check_branch
      %51 = sbr.rel (0) target = $region25
    $region24: #{linear_qnet_forward.1} parent=1 // pred_region
      %52 = dma.done [#allocation3], 128
    $region25: #{linear_qnet_forward.1} parent=1 // pred_fallthru
      _
    // Predicated region
    $region26: #{linear_qnet_forward.1} parent=1 // pred_check
      _
    $region27: #{linear_qnet_forward.1} parent=1 // pred_check_branch
      %54 = sbr.rel (0) target = $region29
    $region28: #{linear_qnet_forward.1} parent=1 // pred_region
      %55 = dma.done [#allocation5], 256
    $region29: #{linear_qnet_forward.1} parent=1 // pred_fallthru
      _
    // Predicated region
    $region30: #{linear_qnet_forward.1} parent=1 // pred_check
      _
    $region31: #{linear_qnet_forward.1} parent=1 // pred_check_branch
      %57 = sbr.rel (0) target = $region33
    $region32: #{linear_qnet_forward.1} parent=1 // pred_region
      %58 = dma.done [#allocation5], 2048
    $region33: #{linear_qnet_forward.1} parent=1 // pred_fallthru
      _
    %v59 = vld [vmem:[#allocation2] sm:$0xff]
    %v60 = vld [vmem:[#allocation4] sm:$0xff]
    %v61 = vld [vmem:[#allocation4 + $0x8] sm:$0xff]
    %v62 = vld [vmem:[%s2] sm:$0x1]
    %v64 = vlaneseq
    %v65 = vshrl.u32 %v64, 7
    %v66 = vsub.s32 0, %v65
    %v67 = vrot.slane %v62, %v66
    %vm69 = vcmask 130048
    %v71 = vsel %vm69, %v59, 0
    %73 = vmatprep.subr.mxu0 0.0
    %74 = vmatpush1.msra.mxu0 0.0
    %75 = vmatprep.subr.mxu0 0.0
    %76 = vmatpush1.msra.mxu0 0.0
    %77 = vmatprep.subr.mxu0 0.0
    %78 = vmatpush1.msra.mxu0 0.0
    %79 = vmatprep.subr.mxu0 0.0
    %80 = vmatpush1.msra.mxu0 0.0
    %81 = vmatprep.subr.mxu0 0.0
    %82 = vmatpush1.msra.mxu0 0.0
    %83 = vmatprep.subr.mxu0 0.0
    %84 = vmatpush1.msra.mxu0 0.0
    %85 = vmatprep.subr.mxu0 0.0
    %86 = vmatpush1.msra.mxu0 0.0
    %87 = vmatprep.subr.mxu0 0.0
    %88 = vmatpush1.msra.mxu0 0.0
    %89 = vmatprep.subr.mxu0 0.0
    %90 = vmatpush1.msra.mxu0 0.0
    %91 = vmatprep.subr.mxu0 0.0
    %92 = vmatpush1.msra.mxu0 0.0
    %93 = vmatprep.subr.mxu0 0.0
    %94 = vmatpush1.msra.mxu0 0.0
    %95 = vmatprep.subr.mxu0 0.0
    %96 = vmatpush1.msra.mxu0 0.0
    %97 = vmatprep.subr.mxu0 0.0
    %98 = vmatpush1.msra.mxu0 0.0
    %99 = vmatprep.subr.mxu0 0.0
    %100 = vmatpush1.msra.mxu0 0.0
    %101 = vmatprep.subr.mxu0 0.0
    %102 = vmatpush1.msra.mxu0 %v61
    %103 = vmatprep.subr.mxu0 0.0
    %104 = vmatpush1.msra.mxu0 %v60
    %105 = vmatprep.subr.mxu0 0.0
    %106 = vmatpush2.msra.mxu0 0.0
    %107 = vmatprep.subr.mxu0 0.0
    %108 = vmatpush2.msra.mxu0 0.0
    %109 = vmatprep.subr.mxu0 0.0
    %110 = vmatpush2.msra.mxu0 0.0
    %111 = vmatprep.subr.mxu0 0.0
    %112 = vmatpush2.msra.mxu0 0.0
    %113 = vmatprep.subr.mxu0 0.0
    %114 = vmatpush2.msra.mxu0 0.0
    %115 = vmatprep.subr.mxu0 0.0
    %116 = vmatpush2.msra.mxu0 0.0
    %117 = vmatprep.subr.mxu0 0.0
    %118 = vmatpush2.msra.mxu0 0.0
    %119 = vmatprep.subr.mxu0 0.0
    %120 = vmatpush2.msra.mxu0 0.0
    %121 = vmatprep.subr.mxu0 0.0
    %122 = vmatpush2.msra.mxu0 0.0
    %123 = vmatprep.subr.mxu0 0.0
    %124 = vmatpush2.msra.mxu0 0.0
    %125 = vmatprep.subr.mxu0 0.0
    %126 = vmatpush2.msra.mxu0 0.0
    %127 = vmatprep.subr.mxu0 0.0
    %128 = vmatpush2.msra.mxu0 0.0
    %129 = vmatprep.subr.mxu0 0.0
    %130 = vmatpush2.msra.mxu0 0.0
    %131 = vmatprep.subr.mxu0 0.0
    %132 = vmatpush2.msra.mxu0 0.0
    %133 = vmatprep.subr.mxu0 0.0
    %134 = vmatpush2.msra.mxu0 0.0
    %135 = vmatprep.subr.mxu0 0.0
    %136 = vmatpush2.msra.mxu0 0.0
    %137 = vmatprep.mubr.f32.mxu0 0.0
    %138 = vmatmul.mubr.f32.gmra.mxu0 %v71
    %v139 = vpop.f32.mrf.mxu0
    %v140 = vadd.f32 %v67, %v139
    %v141 = vpop.f32.mrf.mxu0
    %142 = vdwg.mxu0
    %v143 = vmax.f32 %v140, 0.0
    %v144 = vld [vmem:[#allocation6] sm:$0xff]
    %v145 = vld [vmem:[#allocation6 + $0x8] sm:$0xff]
    %v146 = vld [vmem:[#allocation6 + $0x10] sm:$0xff]
    %v147 = vld [vmem:[#allocation6 + $0x18] sm:$0xff]
    %v148 = vld [vmem:[#allocation6 + $0x20] sm:$0xff]
    %v149 = vld [vmem:[#allocation6 + $0x28] sm:$0xff]
    %v150 = vld [vmem:[#allocation6 + $0x30] sm:$0xff]
    %v151 = vld [vmem:[#allocation6 + $0x38] sm:$0xff]
    %v152 = vld [vmem:[#allocation6 + $0x40] sm:$0xff]
    %v153 = vld [vmem:[#allocation6 + $0x48] sm:$0xff]
    %v154 = vld [vmem:[#allocation6 + $0x50] sm:$0xff]
    %v155 = vld [vmem:[#allocation6 + $0x58] sm:$0xff]
    %v156 = vld [vmem:[#allocation6 + $0x60] sm:$0xff]
    %v157 = vld [vmem:[#allocation6 + $0x68] sm:$0xff]
    %v158 = vld [vmem:[#allocation6 + $0x70] sm:$0xff]
    %v159 = vld [vmem:[#allocation6 + $0x78] sm:$0xff]
    %160 = vmatprep.subr.mxu0 0.0
    %161 = vmatpush1.msra.mxu0 %v159
    %162 = vmatprep.subr.mxu0 0.0
    %163 = vmatpush1.msra.mxu0 %v158
    %164 = vmatprep.subr.mxu0 0.0
    %165 = vmatpush1.msra.mxu0 %v157
    %166 = vmatprep.subr.mxu0 0.0
    %167 = vmatpush1.msra.mxu0 %v156
    %168 = vmatprep.subr.mxu0 0.0
    %169 = vmatpush1.msra.mxu0 %v155
    %170 = vmatprep.subr.mxu0 0.0
    %171 = vmatpush1.msra.mxu0 %v154
    %172 = vmatprep.subr.mxu0 0.0
    %173 = vmatpush1.msra.mxu0 %v153
    %174 = vmatprep.subr.mxu0 0.0
    %175 = vmatpush1.msra.mxu0 %v152
    %176 = vmatprep.subr.mxu0 0.0
    %177 = vmatpush1.msra.mxu0 %v151
    %178 = vmatprep.subr.mxu0 0.0
    %179 = vmatpush1.msra.mxu0 %v150
    %180 = vmatprep.subr.mxu0 0.0
    %181 = vmatpush1.msra.mxu0 %v149
    %182 = vmatprep.subr.mxu0 0.0
    %183 = vmatpush1.msra.mxu0 %v148
    %184 = vmatprep.subr.mxu0 0.0
    %185 = vmatpush1.msra.mxu0 %v147
    %186 = vmatprep.subr.mxu0 0.0
    %187 = vmatpush1.msra.mxu0 %v146
    %188 = vmatprep.subr.mxu0 0.0
    %189 = vmatpush1.msra.mxu0 %v145
    %190 = vmatprep.subr.mxu0 0.0
    %191 = vmatpush1.msra.mxu0 %v144
    %192 = vmatprep.subr.mxu0 0.0
    %193 = vmatpush2.msra.mxu0 0.0
    %194 = vmatprep.subr.mxu0 0.0
    %195 = vmatpush2.msra.mxu0 0.0
    %196 = vmatprep.subr.mxu0 0.0
    %197 = vmatpush2.msra.mxu0 0.0
    %198 = vmatprep.subr.mxu0 0.0
    %199 = vmatpush2.msra.mxu0 0.0
    %200 = vmatprep.subr.mxu0 0.0
    %201 = vmatpush2.msra.mxu0 0.0
    %202 = vmatprep.subr.mxu0 0.0
    %203 = vmatpush2.msra.mxu0 0.0
    %204 = vmatprep.subr.mxu0 0.0
    %205 = vmatpush2.msra.mxu0 0.0
    %206 = vmatprep.subr.mxu0 0.0
    %207 = vmatpush2.msra.mxu0 0.0
    %208 = vmatprep.subr.mxu0 0.0
    %209 = vmatpush2.msra.mxu0 0.0
    %210 = vmatprep.subr.mxu0 0.0
    %211 = vmatpush2.msra.mxu0 0.0
    %212 = vmatprep.subr.mxu0 0.0
    %213 = vmatpush2.msra.mxu0 0.0
    %214 = vmatprep.subr.mxu0 0.0
    %215 = vmatpush2.msra.mxu0 0.0
    %216 = vmatprep.subr.mxu0 0.0
    %217 = vmatpush2.msra.mxu0 0.0
    %218 = vmatprep.subr.mxu0 0.0
    %219 = vmatpush2.msra.mxu0 0.0
    %220 = vmatprep.subr.mxu0 0.0
    %221 = vmatpush2.msra.mxu0 0.0
    %222 = vmatprep.subr.mxu0 0.0
    %223 = vmatpush2.msra.mxu0 0.0
    %224 = vmatprep.mubr.f32.mxu0 0.0
    %225 = vmatmul.mubr.f32.gmra.mxu0 %v143
    %v226 = vpop.f32.mrf.mxu0
    %v227 = vadd.f32 0.0, %v226
    %v228 = vpop.f32.mrf.mxu0
    %229 = vdwg.mxu0
    %v230 = vld [vmem:[%s4] sm:$0x1]
    %v232 = vlaneseq
    %v233 = vshrl.u32 %v232, 7
    %v234 = vsub.s32 0, %v233
    %v235 = vrot.slane %v230, %v234
    %v237 = vadd.f32 %v227, %v235
    %vm238 = vcmask 31744
    %239 = vst.msk [vmem:[%s5] sm:$0xff] %vm238, %v237
    // Predicated region
    $region34: #{linear_qnet_forward.1} parent=1 // pred_check
      _
    $region35: #{linear_qnet_forward.1} parent=1 // pred_check_branch
      %241 = sbr.rel (0) target = $region37
    $region36: #{linear_qnet_forward.1} parent=1 // pred_region
      _
    $region37: #{linear_qnet_forward.1} parent=1 // pred_fallthru
      _
    // Predicated region
    $region38: #{linear_qnet_forward.1} parent=1 // pred_check
      _
    $region39: #{linear_qnet_forward.1} parent=1 // pred_check_branch
      %243 = sbr.rel (0) target = $region41
    $region40: #{linear_qnet_forward.1} parent=1 // pred_region
      _
    $region41: #{linear_qnet_forward.1} parent=1 // pred_fallthru
      _
    %244 = vsyncpa [#allocation3], 1
    %245 = vsyncpa [#allocation5], 1

</llo_original>
